<compile_context>
chip_gen: v7x
topology: tpu7x:2x2x1
jax: 0.10.0
libtpu: 0.0.40
codegen_flags: <defaults>
</compile_context>

<pallas_src>
import math
import jax
import jax.numpy as jnp
from jax import lax
from jax.experimental import pallas as pl
from jax.experimental.pallas import tpu as pltpu


def _round_up(x, m):
    return ((x + m - 1) // m) * m


def _vmem_capacity_bytes():
    try:
        return int(pltpu.get_tpu_info().vmem_capacity_bytes)
    except Exception:
        return 64 << 20  # conservative fallback: v7x per-TensorCore VMEM


def _supports_buffered_blockspec():
    # Narrow capability probe (construction only) -- avoids a broad runtime
    # try/except that could swallow real lowering errors.
    try:
        pl.BlockSpec((8, 128), lambda i: (0, 0), pipeline_mode=pl.Buffered(1))
        return True
    except Exception:
        return False


def _largest_divisor(n, candidates):
    for c in candidates:
        if n % c == 0:
            return c
    return n


def _pick_tm(M, tm_max=512):
    # Largest power-of-two tile <= tm_max keeping row padding < 128 rows.
    tm = 8
    for cand in (512, 256, 128, 64, 32, 16, 8):
        if cand <= tm_max and _round_up(M, cand) - M < 128:
            tm = cand
            break
    # Ensure >= 2 grid steps (shards across v7x's 2 TCs; harmless on 1-TC chips).
    while tm > 8 and _round_up(M, tm) // tm < 2:
        tm //= 2
    return tm


# --------------------------------------------------------------------------
# Path A: weights fully VMEM-resident; d_ff chunked inside the kernel.
# --------------------------------------------------------------------------
def _make_resident_kernel(n_chunks, tk_ff):
    def kernel(x_ref, w1_ref, b1_ref, w2_ref, b2_ref, o_ref, acc_ref):
        x = x_ref[...]                       # (tm, d_model) -- hoisted load
        acc_ref[...] = jnp.zeros_like(acc_ref)

        if n_chunks == 1:
            h = jnp.dot(x, w1_ref[...], preferred_element_type=jnp.float32)
            h = jnp.maximum(h + b1_ref[...].astype(jnp.float32), 0.0)
            acc_ref[...] += jnp.dot(h.astype(w2_ref.dtype), w2_ref[...],
                                    preferred_element_type=jnp.float32)
        else:
            def body(j, carry):
                off = pl.multiple_of(j * tk_ff, tk_ff)
                w1c = w1_ref[:, pl.ds(off, tk_ff)]
                b1c = b1_ref[:, pl.ds(off, tk_ff)].astype(jnp.float32)
                h = jnp.dot(x, w1c, preferred_element_type=jnp.float32)
                h = jnp.maximum(h + b1c, 0.0).astype(w2_ref.dtype)
                w2c = w2_ref[pl.ds(off, tk_ff), :]
                acc_ref[...] += jnp.dot(h, w2c,
                                        preferred_element_type=jnp.float32)
                return carry
            lax.fori_loop(0, n_chunks, body, 0, unroll=n_chunks <= 4)

        # dropout == identity (eval mode)
        o_ref[...] = (acc_ref[...]
                      + b2_ref[...].astype(jnp.float32)).astype(o_ref.dtype)
    return kernel


def _build_resident_call(M_pad, d_model, d_ff, tm, tk_ff, out_dtype,
                         x_dtype, w_dtype, single_buffer, vmem_cap):
    n_chunks = d_ff // tk_ff
    kernel = _make_resident_kernel(n_chunks, tk_ff)

    def w_spec(shape):
        if single_buffer:
            return pl.BlockSpec(shape, lambda i: (0, 0),
                                pipeline_mode=pl.Buffered(1))
        return pl.BlockSpec(shape, lambda i: (0, 0))

    x_item = jnp.dtype(x_dtype).itemsize
    w_item = jnp.dtype(w_dtype).itemsize
    o_item = jnp.dtype(out_dtype).itemsize

    copies = 1 if single_buffer else 2
    weight_bytes = copies * (2 * d_model * d_ff + d_ff + d_model) * w_item
    stream_bytes = 2 * tm * d_model * (x_item + o_item)   # double-buffered x/out
    acc_bytes = tm * d_model * 4
    h_bytes = tm * tk_ff * (4 + w_item)                   # live chunk intermediate
    need = weight_bytes + stream_bytes + acc_bytes + h_bytes
    vmem_limit = int(min(max(1.25 * need, 32 << 20), 0.9 * vmem_cap))

    flops = 4 * M_pad * d_model * d_ff
    bytes_accessed = (M_pad * d_model * (x_item + o_item)
                      + (2 * d_model * d_ff + d_ff + d_model) * w_item)

    return pl.pallas_call(
        kernel,
        out_shape=jax.ShapeDtypeStruct((M_pad, d_model), out_dtype),
        grid_spec=pltpu.PrefetchScalarGridSpec(
            num_scalar_prefetch=0,
            grid=(M_pad // tm,),
            in_specs=[
                pl.BlockSpec((tm, d_model), lambda i: (i, 0)),  # x rows (streamed)
                w_spec((d_model, d_ff)),                        # W1 (resident)
                w_spec((1, d_ff)),                              # b1
                w_spec((d_ff, d_model)),                        # W2 (resident)
                w_spec((1, d_model)),                           # b2
            ],
            out_specs=pl.BlockSpec((tm, d_model), lambda i: (i, 0)),
            scratch_shapes=[pltpu.VMEM((tm, d_model), jnp.float32)],
        ),
        compiler_params=pltpu.CompilerParams(
            dimension_semantics=("parallel",),
            vmem_limit_bytes=vmem_limit),
        cost_estimate=pl.CostEstimate(flops=int(flops), transcendentals=0,
                                      bytes_accessed=int(bytes_accessed)),
    )


# --------------------------------------------------------------------------
# Path B: weight-tiled fallback (d_ff as a trailing "arbitrary" grid axis).
# --------------------------------------------------------------------------
def ffn_tiled_kernel(x_ref, w1_ref, b1_ref, w2_ref, b2_ref, o_ref, acc_ref):
    k = pl.program_id(1)

    @pl.when(k == 0)
    def _():
        acc_ref[...] = jnp.zeros_like(acc_ref)

    h = jnp.dot(x_ref[...], w1_ref[...], preferred_element_type=jnp.float32)
    h = jnp.maximum(h + b1_ref[...].astype(jnp.float32), 0.0)
    acc_ref[...] += jnp.dot(h.astype(w2_ref.dtype), w2_ref[...],
                            preferred_element_type=jnp.float32)

    @pl.when(k == pl.num_programs(1) - 1)
    def _():
        # dropout == identity (eval mode)
        o_ref[...] = (acc_ref[...]
                      + b2_ref[...].astype(jnp.float32)).astype(o_ref.dtype)


def _build_tiled_call(M_pad, d_model, d_ff, tm, tff, out_dtype,
                      x_dtype, w_dtype, vmem_cap):
    x_item = jnp.dtype(x_dtype).itemsize
    w_item = jnp.dtype(w_dtype).itemsize
    o_item = jnp.dtype(out_dtype).itemsize

    weight_tile_bytes = 2 * (2 * d_model * tff + tff + d_model) * w_item
    stream_bytes = 2 * tm * d_model * (x_item + o_item)
    acc_bytes = tm * d_model * 4
    h_bytes = tm * tff * (4 + w_item)
    need = weight_tile_bytes + stream_bytes + acc_bytes + h_bytes
    vmem_limit = int(min(max(1.25 * need, 32 << 20), 0.9 * vmem_cap))

    n_row = M_pad // tm
    flops = 4 * M_pad * d_model * d_ff
    bytes_accessed = (M_pad * d_model * (x_item + o_item)
                      + n_row * (2 * d_model * d_ff + d_ff + d_model) * w_item)

    return pl.pallas_call(
        ffn_tiled_kernel,
        out_shape=jax.ShapeDtypeStruct((M_pad, d_model), out_dtype),
        grid_spec=pltpu.PrefetchScalarGridSpec(
            num_scalar_prefetch=0,
            grid=(n_row, d_ff // tff),
            in_specs=[
                pl.BlockSpec((tm, d_model), lambda i, k: (i, 0)),   # x rows
                pl.BlockSpec((d_model, tff), lambda i, k: (0, k)),  # W1 tile
                pl.BlockSpec((1, tff), lambda i, k: (0, k)),        # b1 tile
                pl.BlockSpec((tff, d_model), lambda i, k: (k, 0)),  # W2 tile
                pl.BlockSpec((1, d_model), lambda i, k: (0, 0)),    # b2
            ],
            out_specs=pl.BlockSpec((tm, d_model), lambda i, k: (i, 0)),
            scratch_shapes=[pltpu.VMEM((tm, d_model), jnp.float32)],
        ),
        compiler_params=pltpu.CompilerParams(
            dimension_semantics=("parallel", "arbitrary"),
            vmem_limit_bytes=vmem_limit),
        cost_estimate=pl.CostEstimate(flops=int(flops), transcendentals=0,
                                      bytes_accessed=int(bytes_accessed)),
    )


# --------------------------------------------------------------------------
# Wrapper
# --------------------------------------------------------------------------
def positionwise_ffn(x, w1, b1, w2, b2, *, tm_max=512, compute_dtype=None,
                     force_path=None, tk_ff=None, tff=None):
    """x: (B, S, d_model); w1: (d_model, d_ff); b1: (d_ff,);
       w2: (d_ff, d_model); b2: (d_model,). Returns (B, S, d_model)."""
    B, S, d_model = x.shape
    d_ff = w1.shape[1]
    M = B * S
    out_dtype = x.dtype

    # Optional MXU-native operand policy (e.g. bf16); accumulation stays f32.
    if compute_dtype is not None:
        x = x.astype(compute_dtype)
        w1 = w1.astype(compute_dtype)
        w2 = w2.astype(compute_dtype)

    tm = _pick_tm(M, tm_max)
    M_pad = _round_up(M, tm)

    x2d = x.reshape(M, d_model)
    if M_pad != M:
        # Padded rows compute relu(b1) @ W2 + b2 garbage; they are sliced off
        # below (waste bounded to < 128 rows by _pick_tm).
        x2d = jnp.pad(x2d, ((0, M_pad - M), (0, 0)))
    b1_2d = b1.reshape(1, d_ff)
    b2_2d = b2.reshape(1, d_model)

    vmem_cap = _vmem_capacity_bytes()
    single_buffer = _supports_buffered_blockspec()
    w_item = jnp.dtype(w1.dtype).itemsize
    copies = 1 if single_buffer else 2
    weight_bytes = copies * 2 * d_model * d_ff * w_item

    if force_path is not None:
        use_resident = (force_path == "resident")
    else:
        # Resident weights only if they leave headroom (v7x: ~45 MiB of 64;
        # v5e/v6e: ~90 MiB of 128).
        use_resident = weight_bytes <= 0.7 * vmem_cap

    args = (x2d, w1, b1_2d, w2, b2_2d)
    if use_resident:
        tkf = tk_ff if tk_ff is not None else _largest_divisor(
            d_ff, (512, 256, 128, 64))
        call = _build_resident_call(M_pad, d_model, d_ff, tm, tkf, out_dtype,
                                    x2d.dtype, w1.dtype, single_buffer, vmem_cap)
    else:
        tf = tff if tff is not None else _largest_divisor(
            d_ff, (1024, 512, 256, 128))
        call = _build_tiled_call(M_pad, d_model, d_ff, tm, tf, out_dtype,
                                 x2d.dtype, w1.dtype, vmem_cap)

    out2d = call(*args)
    return out2d[:M].reshape(B, S, d_model)


def init_params(key, d_model, d_ff, dtype=jnp.float32):
    """Deterministic init matching nn.Linear's U(-1/sqrt(fan_in), 1/sqrt(fan_in))."""
    k1, k2, k3, k4 = jax.random.split(key, 4)
    bound1 = 1.0 / math.sqrt(d_model)
    bound2 = 1.0 / math.sqrt(d_ff)
    # stored pre-transposed: (in, out)
    w1 = jax.random.uniform(k1, (d_model, d_ff), dtype, -bound1, bound1)
    b1 = jax.random.uniform(k2, (d_ff,), dtype, -bound1, bound1)
    w2 = jax.random.uniform(k3, (d_ff, d_model), dtype, -bound2, bound2)
    b2 = jax.random.uniform(k4, (d_model,), dtype, -bound2, bound2)
    return w1, b1, w2, b2


if __name__ == "__main__":
    key = jax.random.PRNGKey(0)
    B, S, d_model, d_ff = 2, 8, 32, 256

    kx, kp = jax.random.split(key)
    x = jax.random.normal(kx, (B, S, d_model), jnp.float32)
    w1, b1, w2, b2 = init_params(kp, d_model, d_ff)

    # pure-JAX reference (highest precision f32 dots)
    x2d = x.reshape(-1, d_model)
    ref = jnp.maximum(
        jnp.dot(x2d, w1, precision=jax.lax.Precision.HIGHEST) + b1, 0.0)
    ref = (jnp.dot(ref, w2, precision=jax.lax.Precision.HIGHEST) + b2)
    ref = ref.reshape(B, S, d_model)

    # 1) default path: resident weights, f32 operands
    out = jax.block_until_ready(positionwise_ffn(x, w1, b1, w2, b2))
    assert out.shape == (B, S, d_model)
    assert jnp.allclose(out, ref, atol=1e-4, rtol=1e-4), "resident path mismatch"

    # 2) resident path exercising the in-kernel d_ff chunk loop (n_chunks=2)
    out_c = jax.block_until_ready(
        positionwise_ffn(x, w1, b1, w2, b2, force_path="resident", tk_ff=128))
    assert jnp.allclose(out_c, ref, atol=1e-4, rtol=1e-4), "chunked path mismatch"

    # 3) weight-tiled fallback path (d_ff as a grid axis)
    out_t = jax.block_until_ready(
        positionwise_ffn(x, w1, b1, w2, b2, force_path="tiled", tff=128))
    assert jnp.allclose(out_t, ref, atol=1e-4, rtol=1e-4), "tiled path mismatch"

    # 4) bf16 operand policy (MXU-native); f32 accumulation, loose tolerance
    out_bf = jax.block_until_ready(
        positionwise_ffn(x, w1, b1, w2, b2, compute_dtype=jnp.bfloat16))
    assert out_bf.dtype == x.dtype
    assert jnp.allclose(out_bf, ref, atol=1e-1, rtol=1e-1), "bf16 path mismatch"

    print("KERNEL_OK")
</pallas_src>

<mosaic_0001>
module attributes {stable_mosaic.version = 11 : i64} {
  func.func @kernel(%arg0: i32, %arg1: memref<8x32xf32, #tpu.memory_space<vmem>>, %arg2: memref<32x256xf32, #tpu.memory_space<vmem>>, %arg3: memref<1x256xf32, #tpu.memory_space<vmem>>, %arg4: memref<256x32xf32, #tpu.memory_space<vmem>>, %arg5: memref<1x32xf32, #tpu.memory_space<vmem>>, %arg6: memref<8x32xf32, #tpu.memory_space<vmem>>, %arg7: memref<8x32xf32, #tpu.memory_space<vmem>>) attributes {dimension_semantics = [#tpu.dimension_semantics<parallel>], iteration_bounds = array<i64: 2>, scalar_prefetch = 0 : i64, scratch_operands = 1 : i64, tpu.core_type = #tpu.core_type<tc>, window_params = [{transform_indices = @transform_0, window_bounds = array<i64: 8, 32>}, {pipeline_mode = #tpu.pipeline_mode<synchronous>, transform_indices = @transform_1, window_bounds = array<i64: 32, 256>}, {pipeline_mode = #tpu.pipeline_mode<synchronous>, transform_indices = @transform_2, window_bounds = array<i64: 1, 256>}, {pipeline_mode = #tpu.pipeline_mode<synchronous>, transform_indices = @transform_3, window_bounds = array<i64: 256, 32>}, {pipeline_mode = #tpu.pipeline_mode<synchronous>, transform_indices = @transform_4, window_bounds = array<i64: 1, 32>}, {transform_indices = @transform_5, window_bounds = array<i64: 8, 32>}]} {
    %c0 = arith.constant 0 : index
    %c0_0 = arith.constant 0 : index
    %0 = vector.load %arg1[%c0, %c0_0] : memref<8x32xf32, #tpu.memory_space<vmem>>, vector<8x32xf32>
    %cst = arith.constant 0.000000e+00 : f32
    %1 = vector.broadcast %cst : f32 to vector<8x32xf32>
    %c0_1 = arith.constant 0 : index
    %c0_2 = arith.constant 0 : index
    %2 = vector.load %arg7[%c0_1, %c0_2] : memref<8x32xf32, #tpu.memory_space<vmem>>, vector<8x32xf32>
    tpu.vector_store %arg7[%c0_1, %c0_2], %1 {strides = array<i32>} : memref<8x32xf32, #tpu.memory_space<vmem>>, vector<8x32xf32>,
    %c0_3 = arith.constant 0 : index
    %c0_4 = arith.constant 0 : index
    %3 = vector.load %arg2[%c0_3, %c0_4] : memref<32x256xf32, #tpu.memory_space<vmem>>, vector<32x256xf32>
    %cst_5 = arith.constant dense<0.000000e+00> : vector<8x256xf32>
    %4 = tpu.matmul %0, %3, %cst_5 {dimension_numbers = #tpu.dot_dimension_numbers<[1], [0], [0], [1], [0, 0, 1, 1], [], []>} : vector<8x32xf32>, vector<32x256xf32>, vector<8x256xf32> -> vector<8x256xf32>
    %c0_6 = arith.constant 0 : index
    %c0_7 = arith.constant 0 : index
    %5 = vector.load %arg3[%c0_6, %c0_7] : memref<1x256xf32, #tpu.memory_space<vmem>>, vector<1x256xf32>
    %6 = vector.broadcast %5 : vector<1x256xf32> to vector<8x256xf32>
    %7 = arith.addf %4, %6 : vector<8x256xf32>
    %cst_8 = arith.constant 0.000000e+00 : f32
    %8 = vector.broadcast %cst_8 : f32 to vector<8x256xf32>
    %9 = arith.maximumf %7, %8 : vector<8x256xf32>
    %c0_9 = arith.constant 0 : index
    %c0_10 = arith.constant 0 : index
    %10 = vector.load %arg7[%c0_9, %c0_10] : memref<8x32xf32, #tpu.memory_space<vmem>>, vector<8x32xf32>
    %c0_11 = arith.constant 0 : index
    %c0_12 = arith.constant 0 : index
    %11 = vector.load %arg4[%c0_11, %c0_12] : memref<256x32xf32, #tpu.memory_space<vmem>>, vector<256x32xf32>
    %cst_13 = arith.constant dense<0.000000e+00> : vector<8x32xf32>
    %12 = tpu.matmul %9, %11, %cst_13 {dimension_numbers = #tpu.dot_dimension_numbers<[1], [0], [0], [1], [0, 0, 1, 1], [], []>} : vector<8x256xf32>, vector<256x32xf32>, vector<8x32xf32> -> vector<8x32xf32>
    %13 = arith.addf %10, %12 : vector<8x32xf32>
    %c0_14 = arith.constant 0 : index
    %c0_15 = arith.constant 0 : index
    %14 = vector.load %arg7[%c0_14, %c0_15] : memref<8x32xf32, #tpu.memory_space<vmem>>, vector<8x32xf32>
    tpu.vector_store %arg7[%c0_14, %c0_15], %13 {strides = array<i32>} : memref<8x32xf32, #tpu.memory_space<vmem>>, vector<8x32xf32>,
    %c0_16 = arith.constant 0 : index
    %c0_17 = arith.constant 0 : index
    %15 = vector.load %arg7[%c0_16, %c0_17] : memref<8x32xf32, #tpu.memory_space<vmem>>, vector<8x32xf32>
    %c0_18 = arith.constant 0 : index
    %c0_19 = arith.constant 0 : index
    %16 = vector.load %arg5[%c0_18, %c0_19] : memref<1x32xf32, #tpu.memory_space<vmem>>, vector<1x32xf32>
    %17 = vector.broadcast %16 : vector<1x32xf32> to vector<8x32xf32>
    %18 = arith.addf %15, %17 : vector<8x32xf32>
    %c0_20 = arith.constant 0 : index
    %c0_21 = arith.constant 0 : index
    %19 = vector.load %arg6[%c0_20, %c0_21] : memref<8x32xf32, #tpu.memory_space<vmem>>, vector<8x32xf32>
    tpu.vector_store %arg6[%c0_20, %c0_21], %18 {strides = array<i32>} : memref<8x32xf32, #tpu.memory_space<vmem>>, vector<8x32xf32>,
    return
  }
  func.func @transform_0(%arg0: i32) -> (i32, i32) {
    %c0_i32 = arith.constant 0 : i32
    %c0_i32_0 = arith.constant 0 : i32
    return %arg0, %c0_i32 : i32, i32
  }
  func.func @transform_1(%arg0: i32) -> (i32, i32) {
    %c0_i32 = arith.constant 0 : i32
    %c0_i32_0 = arith.constant 0 : i32
    %c0_i32_1 = arith.constant 0 : i32
    return %c0_i32, %c0_i32_0 : i32, i32
  }
  func.func @transform_2(%arg0: i32) -> (i32, i32) {
    %c0_i32 = arith.constant 0 : i32
    %c0_i32_0 = arith.constant 0 : i32
    %c0_i32_1 = arith.constant 0 : i32
    return %c0_i32, %c0_i32_0 : i32, i32
  }
  func.func @transform_3(%arg0: i32) -> (i32, i32) {
    %c0_i32 = arith.constant 0 : i32
    %c0_i32_0 = arith.constant 0 : i32
    %c0_i32_1 = arith.constant 0 : i32
    return %c0_i32, %c0_i32_0 : i32, i32
  }
  func.func @transform_4(%arg0: i32) -> (i32, i32) {
    %c0_i32 = arith.constant 0 : i32
    %c0_i32_0 = arith.constant 0 : i32
    %c0_i32_1 = arith.constant 0 : i32
    return %c0_i32, %c0_i32_0 : i32, i32
  }
  func.func @transform_5(%arg0: i32) -> (i32, i32) {
    %c0_i32 = arith.constant 0 : i32
    %c0_i32_0 = arith.constant 0 : i32
    return %arg0, %c0_i32 : i32, i32
  }
}

</mosaic_0001>

<llo_original>
// kernel: tpu_custom_call.1
$region0: #{tpu_custom_call.1}
  #allocation0 [shape = 'u32[]', space=smem, size = 0x4, offset = 0x4, fixed_abs, tag = 'smem constant byte address 0x4 - core index']
  #allocation1 [shape = 'u32[144,128]{1,0:T(1,128)}', space=vmem, size = 0x12000, scoped, tag = 'internal scratch']
  #allocation2 [shape = 'f32[8,32]{1,0:T(8,128)}', space=vmem, size = 0x1000, scoped, tag = 'scratch operand']
  %s0 = inlined_call_operand.vmem [shape: f32[16,32], index: 0, kind: input, shape index: {}]
  %s1 = inlined_call_operand.vmem [shape: f32[32,256], index: 1, kind: input, shape index: {}]
  %s2 = inlined_call_operand.vmem [shape: f32[1,256], index: 2, kind: input, shape index: {}]
  %s3 = inlined_call_operand.vmem [shape: f32[256,32], index: 3, kind: input, shape index: {}]
  %s4 = inlined_call_operand.vmem [shape: f32[1,32], index: 4, kind: input, shape index: {}]
  %s5 = inlined_call_operand.hbm [shape: f32[16,32], index: 5, kind: output, shape index: {}]
  %s6 = sld [smem:[#allocation0]]
  $region53: #{tpu_custom_call.1} parent=0
    _
  %s8 = ssub.s32 1, %s6
  %s9 = scalar_select 0, %s8, %s6
  $region1: #{tpu_custom_call.1} parent=0
    #allocation3 [shape = 'u8[8192]{0}', space=vmem, size = 0x2000, scoped, tag = 'output window, operand 0']
    #allocation4 [shape = 's32[2]{0}', space=sflag, size = 0x8, scoped, tag = 'scoped memory for tpu_custom_call.1']
    %10 = vsyncpa [#allocation4], 0
    %s11 = scalar_lea.sflag [#allocation4], 1
    %12 = vsyncpa %s11, 0
    loop: start=0, step=1, limit=4
    $region2: #{tpu_custom_call.1} parent=1 // loop_pre_header
      _
    $region3: #{tpu_custom_call.1} parent=1 // loop_header
      %s14 = sphi 0, %s18
      %p15 = scmp.ge.s32.totalorder %s14, 4
      %s24 = sphi 0, %s26
      %s27 = sphi 0, %s24
      %s28 = sphi 0, %s27
      %s44 = sphi 0, %s28
      %s48 = sphi 0, %s48
      %s50 = sphi 0, %s48
      %s51 = sphi 0, %s50
      %s65 = sphi 0, %s51
      %s69 = sphi 0, %s69
      %s71 = sphi 0, %s69
      %s72 = sphi 0, %s71
      %s86 = sphi 0, %s72
      %s90 = sphi 0, %s90
      %s92 = sphi 0, %s90
      %s93 = sphi 0, %s92
      %s107 = sphi 0, %s93
      %s111 = sphi 0, %s111
      %s113 = sphi 0, %s111
      %s114 = sphi 0, %s113
      %s128 = sphi 0, %s114
      %s134 = sphi 0, %s136
      %s137 = sphi 0, %s134
      %s138 = sphi 0, %s137
      %s154 = sphi 0, %s138
    $region4: #{tpu_custom_call.1} parent=1 // loop_header_branch
      %17 = sbr.rel (%p15) target = $region8
    $region5: #{tpu_custom_call.1} parent=1 // loop_body
      %s19 = ssub.s32 %s14, 1
      %s20 = ssub.s32 %s14, 2
      %s21 = sadd.s32 %s14, 1
      %s22 = ssub.s32 %s14, %s21
      %p23 = scmp.eq.s32.totalorder %s22, 0
      %s25 = sadd.s32 %s24, 1
      %s26 = scalar_select %p23, %s24, %s25
      %p29 = pneg %p23
      %p30 = scmp.eq.s32.totalorder %s14, 1
      %p31 = por %p29, %p30
      %p32 = scmp.ne.s32.totalorder %s24, %s27
      %p33 = scmp.eq.s32.totalorder %s14, 0
      %p34 = por %p32, %p33
      %p35 = scmp.ne.s32.totalorder %s24, %s27
      %p36 = scmp.eq.s32.totalorder %s19, 1
      %p37 = por %p35, %p36
      %p38 = scmp.ne.s32.totalorder %s27, %s28
      %p39 = scmp.eq.s32.totalorder %s19, 0
      %p40 = por %p38, %p39
      %p41 = scmp.ne.s32.totalorder %s27, %s28
      %p42 = scmp.eq.s32.totalorder %s20, 1
      %p43 = por %p41, %p42
      %p45 = scmp.ne.s32.totalorder %s28, %s44
      %p46 = scmp.eq.s32.totalorder %s20, 0
      %p47 = por %p45, %p46
      %s49 = sadd.s32 %s48, 1
      %p52 = scmp.eq.s32.totalorder %s14, 1
      %p53 = scmp.ne.s32.totalorder %s48, %s50
      %p54 = scmp.eq.s32.totalorder %s14, 0
      %p55 = por %p53, %p54
      %p56 = scmp.ne.s32.totalorder %s48, %s50
      %p57 = scmp.eq.s32.totalorder %s19, 1
      %p58 = por %p56, %p57
      %p59 = scmp.ne.s32.totalorder %s50, %s51
      %p60 = scmp.eq.s32.totalorder %s19, 0
      %p61 = por %p59, %p60
      %p62 = scmp.ne.s32.totalorder %s50, %s51
      %p63 = scmp.eq.s32.totalorder %s20, 1
      %p64 = por %p62, %p63
      %p66 = scmp.ne.s32.totalorder %s51, %s65
      %p67 = scmp.eq.s32.totalorder %s20, 0
      %p68 = por %p66, %p67
      %s70 = sadd.s32 %s69, 1
      %p73 = scmp.eq.s32.totalorder %s14, 1
      %p74 = scmp.ne.s32.totalorder %s69, %s71
      %p75 = scmp.eq.s32.totalorder %s14, 0
      %p76 = por %p74, %p75
      %p77 = scmp.ne.s32.totalorder %s69, %s71
      %p78 = scmp.eq.s32.totalorder %s19, 1
      %p79 = por %p77, %p78
      %p80 = scmp.ne.s32.totalorder %s71, %s72
      %p81 = scmp.eq.s32.totalorder %s19, 0
      %p82 = por %p80, %p81
      %p83 = scmp.ne.s32.totalorder %s71, %s72
      %p84 = scmp.eq.s32.totalorder %s20, 1
      %p85 = por %p83, %p84
      %p87 = scmp.ne.s32.totalorder %s72, %s86
      %p88 = scmp.eq.s32.totalorder %s20, 0
      %p89 = por %p87, %p88
      %s91 = sadd.s32 %s90, 1
      %p94 = scmp.eq.s32.totalorder %s14, 1
      %p95 = scmp.ne.s32.totalorder %s90, %s92
      %p96 = scmp.eq.s32.totalorder %s14, 0
      %p97 = por %p95, %p96
      %p98 = scmp.ne.s32.totalorder %s90, %s92
      %p99 = scmp.eq.s32.totalorder %s19, 1
      %p100 = por %p98, %p99
      %p101 = scmp.ne.s32.totalorder %s92, %s93
      %p102 = scmp.eq.s32.totalorder %s19, 0
      %p103 = por %p101, %p102
      %p104 = scmp.ne.s32.totalorder %s92, %s93
      %p105 = scmp.eq.s32.totalorder %s20, 1
      %p106 = por %p104, %p105
      %p108 = scmp.ne.s32.totalorder %s93, %s107
      %p109 = scmp.eq.s32.totalorder %s20, 0
      %p110 = por %p108, %p109
      %s112 = sadd.s32 %s111, 1
      %p115 = scmp.eq.s32.totalorder %s14, 1
      %p116 = scmp.ne.s32.totalorder %s111, %s113
      %p117 = scmp.eq.s32.totalorder %s14, 0
      %p118 = por %p116, %p117
      %p119 = scmp.ne.s32.totalorder %s111, %s113
      %p120 = scmp.eq.s32.totalorder %s19, 1
      %p121 = por %p119, %p120
      %p122 = scmp.ne.s32.totalorder %s113, %s114
      %p123 = scmp.eq.s32.totalorder %s19, 0
      %p124 = por %p122, %p123
      %p125 = scmp.ne.s32.totalorder %s113, %s114
      %p126 = scmp.eq.s32.totalorder %s20, 1
      %p127 = por %p125, %p126
      %p129 = scmp.ne.s32.totalorder %s114, %s128
      %p130 = scmp.eq.s32.totalorder %s20, 0
      %p131 = por %p129, %p130
      %s132 = ssub.s32 %s14, %s21
      %p133 = scmp.eq.s32.totalorder %s132, 0
      %s135 = sadd.s32 %s134, 1
      %s136 = scalar_select %p133, %s134, %s135
      %p139 = pneg %p133
      %p140 = scmp.eq.s32.totalorder %s14, 1
      %p141 = por %p139, %p140
      %p142 = scmp.ne.s32.totalorder %s134, %s137
      %p143 = scmp.eq.s32.totalorder %s14, 0
      %p144 = por %p142, %p143
      %p145 = scmp.ne.s32.totalorder %s134, %s137
      %p146 = scmp.eq.s32.totalorder %s19, 1
      %p147 = por %p145, %p146
      %p148 = scmp.ne.s32.totalorder %s137, %s138
      %p149 = scmp.eq.s32.totalorder %s19, 0
      %p150 = por %p148, %p149
      %p151 = scmp.ne.s32.totalorder %s137, %s138
      %p152 = scmp.eq.s32.totalorder %s20, 1
      %p153 = por %p151, %p152
      %p155 = scmp.ne.s32.totalorder %s138, %s154
      %p156 = scmp.eq.s32.totalorder %s20, 0
      %p157 = por %p155, %p156
      %p158 = scmp.le.s32.totalorder 1, %s14
      %p159 = scmp.lt.s32.totalorder %s14, 3
      %p160 = pnand %p158, %p159
      %p161 = pneg %p160
      // Predicated region
      $region9: #{tpu_custom_call.1} parent=5 // pred_check
        _
      $region10: #{tpu_custom_call.1} parent=5 // pred_check_branch
        %163 = sbr.rel (%p160) target = $region12
      $region11: #{tpu_custom_call.1} parent=5 // pred_region
        %s164 = ssub.s32 %s14, 1
        // Predicated region
        $region13: #{tpu_custom_call.1} parent=11 // pred_check
          %p165 = pneg %p61
        $region14: #{tpu_custom_call.1} parent=11 // pred_check_branch
          %167 = sbr.rel (%p165) target = $region16
        $region15: #{tpu_custom_call.1} parent=11 // pred_region
          _
        $region16: #{tpu_custom_call.1} parent=11 // pred_fallthru
          _
        // Predicated region
        $region17: #{tpu_custom_call.1} parent=11 // pred_check
          %p168 = pneg %p82
        $region18: #{tpu_custom_call.1} parent=11 // pred_check_branch
          %170 = sbr.rel (%p168) target = $region20
        $region19: #{tpu_custom_call.1} parent=11 // pred_region
          _
        $region20: #{tpu_custom_call.1} parent=11 // pred_fallthru
          _
        // Predicated region
        $region21: #{tpu_custom_call.1} parent=11 // pred_check
          %p171 = pneg %p103
        $region22: #{tpu_custom_call.1} parent=11 // pred_check_branch
          %173 = sbr.rel (%p171) target = $region24
        $region23: #{tpu_custom_call.1} parent=11 // pred_region
          _
        $region24: #{tpu_custom_call.1} parent=11 // pred_fallthru
          _
        // Predicated region
        $region25: #{tpu_custom_call.1} parent=11 // pred_check
          %p174 = pneg %p124
        $region26: #{tpu_custom_call.1} parent=11 // pred_check_branch
          %176 = sbr.rel (%p174) target = $region28
        $region27: #{tpu_custom_call.1} parent=11 // pred_region
          _
        $region28: #{tpu_custom_call.1} parent=11 // pred_fallthru
          _
      $region12: #{tpu_custom_call.1} parent=5 // pred_fallthru
        _
      %p177 = scmp.lt.s32.totalorder %s14, 2
      // Predicated region
      $region29: #{tpu_custom_call.1} parent=5 // pred_check
        %p178 = pneg %p177
      $region30: #{tpu_custom_call.1} parent=5 // pred_check_branch
        %180 = sbr.rel (%p178) target = $region32
      $region31: #{tpu_custom_call.1} parent=5 // pred_region
        // Predicated region
        $region33: #{tpu_custom_call.1} parent=31 // pred_check
          %p181 = pneg %p34
        $region34: #{tpu_custom_call.1} parent=31 // pred_check_branch
          %183 = sbr.rel (%p181) target = $region36
        $region35: #{tpu_custom_call.1} parent=31 // pred_region
          %p184 = scmp.lt.s32.totalorder %s14, 1
          %s185 = scalar_select %p184, %s14, 1
          %s186 = smul.addr %s185, 8
          %s187 = scalar_lea.vmem %s0, %s186
        $region36: #{tpu_custom_call.1} parent=31 // pred_fallthru
          _
      $region32: #{tpu_custom_call.1} parent=5 // pred_fallthru
        _
      %p188 = scmp.le.s32.totalorder 1, %s14
      %p189 = scmp.lt.s32.totalorder %s14, 3
      %p190 = pnand %p188, %p189
      %p191 = pneg %p190
      // Predicated region
      $region37: #{tpu_custom_call.1} parent=5 // pred_check
        _
      $region38: #{tpu_custom_call.1} parent=5 // pred_check_branch
        %193 = sbr.rel (%p190) target = $region40
      $region39: #{tpu_custom_call.1} parent=5 // pred_region
        %s194 = ssub.s32 %s14, 1
        %p195 = scmp.lt.s32.totalorder %s19, 1
        %s196 = scalar_select %p195, %s19, 1
        %s197 = smul.addr %s196, 8
        %s198 = scalar_lea.vmem %s0, %s197
        %p199 = pneg %p40
        %p200 = pneg %p37
        %p201 = pneg %p61
        %p202 = pneg %p58
        %p203 = pneg %p82
        %p204 = pneg %p79
        %p205 = pneg %p103
        %p206 = pneg %p100
        %p207 = pneg %p124
        %p208 = pneg %p121
        %p209 = pneg %p150
        %p210 = pneg %p147
        %s211 = sand.u32 %s137, 1
        %s212 = scalar_lea.sflag [#allocation4], %s211
        %s213 = sand.u32 %s137, 1
        %s214 = smul.addr %s213, 8
        %s215 = scalar_lea.vmem [#allocation3], %s214
        %p216 = scmp.lt.s32.totalorder %s19, 1
        %s217 = scalar_select %p216, %s19, 1
        %s218 = smul.addr %s217, 8
        %s219 = scalar_lea.vmem %s0, %s218
        %v220 = vld [vmem:[%s219] sm:$0xff]
        %vm221 = vcmask 261120
        %222 = vst.msk [vmem:[#allocation2] sm:$0xff] %vm221, 0.0
        %v223 = vld [vmem:[%s1] sm:$0xff]
        %v224 = vld [vmem:[%s1 + $0x8] sm:$0xff]
        %v225 = vld [vmem:[%s1 + $0x10] sm:$0xff]
        %v226 = vld [vmem:[%s1 + $0x18] sm:$0xff]
        %v227 = vld [vmem:[%s1 + $0x20] sm:$0xff]
        %v228 = vld [vmem:[%s1 + $0x28] sm:$0xff]
        %v229 = vld [vmem:[%s1 + $0x30] sm:$0xff]
        %v230 = vld [vmem:[%s1 + $0x38] sm:$0xff]
        %v231 = vld [vmem:[%s2] sm:$0x3]
        %v233 = vlaneseq
        %v234 = vshrl.u32 %v233, 7
        %v235 = vsub.s32 0, %v234
        %v236 = vrot.slane %v231, %v235
        %v237 = vlaneseq
        %v238 = vshrl.u32 %v237, 7
        %v239 = vsub.s32 1, %v238
        %v240 = vrot.slane %v231, %v239
        %v244 = vsel %vm221, %v220, 0
        %246 = vmatprep.subr.mxu0 %v224
        %247 = vmatpush1.msra.mxu0 %v223
        %248 = vmatprep.subr.mxu0 %v226
        %249 = vmatpush1.msra.mxu0 %v225
        %250 = vmatprep.subr.mxu0 %v228
        %251 = vmatpush1.msra.mxu0 %v227
        %252 = vmatprep.subr.mxu0 %v230
        %253 = vmatpush1.msra.mxu0 %v229
        %254 = vmatprep.subr.mxu0 0.0
        %255 = vmatpush1.msra.mxu0 0.0
        %256 = vmatprep.subr.mxu0 0.0
        %257 = vmatpush1.msra.mxu0 0.0
        %258 = vmatprep.subr.mxu0 0.0
        %259 = vmatpush1.msra.mxu0 0.0
        %260 = vmatprep.subr.mxu0 0.0
        %261 = vmatpush1.msra.mxu0 0.0
        %262 = vmatprep.subr.mxu0 0.0
        %263 = vmatpush1.msra.mxu0 0.0
        %264 = vmatprep.subr.mxu0 0.0
        %265 = vmatpush1.msra.mxu0 0.0
        %266 = vmatprep.subr.mxu0 0.0
        %267 = vmatpush1.msra.mxu0 0.0
        %268 = vmatprep.subr.mxu0 0.0
        %269 = vmatpush1.msra.mxu0 0.0
        %270 = vmatprep.subr.mxu0 0.0
        %271 = vmatpush1.msra.mxu0 0.0
        %272 = vmatprep.subr.mxu0 0.0
        %273 = vmatpush1.msra.mxu0 0.0
        %274 = vmatprep.subr.mxu0 0.0
        %275 = vmatpush1.msra.mxu0 0.0
        %276 = vmatprep.subr.mxu0 0.0
        %277 = vmatpush1.msra.mxu0 0.0
        %278 = vmatprep.subr.mxu0 0.0
        %279 = vmatpush1.msra.mxu0 0.0
        %280 = vmatprep.subr.mxu0 0.0
        %281 = vmatpush1.msra.mxu0 0.0
        %282 = vmatprep.subr.mxu0 0.0
        %283 = vmatpush1.msra.mxu0 0.0
        %284 = vmatprep.subr.mxu0 0.0
        %285 = vmatpush1.msra.mxu0 0.0
        %286 = vmatprep.subr.mxu0 0.0
        %287 = vmatpush1.msra.mxu0 0.0
        %288 = vmatprep.subr.mxu0 0.0
        %289 = vmatpush1.msra.mxu0 0.0
        %290 = vmatprep.subr.mxu0 0.0
        %291 = vmatpush1.msra.mxu0 0.0
        %292 = vmatprep.subr.mxu0 0.0
        %293 = vmatpush1.msra.mxu0 0.0
        %294 = vmatprep.subr.mxu0 0.0
        %295 = vmatpush1.msra.mxu0 0.0
        %296 = vmatprep.subr.mxu0 0.0
        %297 = vmatpush1.msra.mxu0 0.0
        %298 = vmatprep.subr.mxu0 0.0
        %299 = vmatpush1.msra.mxu0 0.0
        %300 = vmatprep.subr.mxu0 0.0
        %301 = vmatpush1.msra.mxu0 0.0
        %302 = vmatprep.subr.mxu0 0.0
        %303 = vmatpush1.msra.mxu0 0.0
        %304 = vmatprep.subr.mxu0 0.0
        %305 = vmatpush1.msra.mxu0 0.0
        %306 = vmatprep.subr.mxu0 0.0
        %307 = vmatpush1.msra.mxu0 0.0
        %308 = vmatprep.subr.mxu0 0.0
        %309 = vmatpush1.msra.mxu0 0.0
        %310 = vmatprep.mubr.f32.mxu0 0.0
        %311 = vmatmul.mubr.f32.gmra.mrb[0].mxu0 %v244
        %v312 = vpop.f32.mrb[0].mxu0
        %v313 = vadd.f32 %v236, %v312
        %v314 = vpop.f32.mrb[0].mxu0
        %v315 = vadd.f32 %v240, %v314
        %316 = vdwg.mxu0
        %v317 = vmax.f32 %v313, 0.0
        %v318 = vmax.f32 %v315, 0.0
        %v319 = vld [vmem:[#allocation2] sm:$0xff]
        %v320 = vld [vmem:[%s3] sm:$0xff]
        %v321 = vld [vmem:[%s3 + $0x8] sm:$0xff]
        %v322 = vld [vmem:[%s3 + $0x10] sm:$0xff]
        %v323 = vld [vmem:[%s3 + $0x18] sm:$0xff]
        %v324 = vld [vmem:[%s3 + $0x20] sm:$0xff]
        %v325 = vld [vmem:[%s3 + $0x28] sm:$0xff]
        %v326 = vld [vmem:[%s3 + $0x30] sm:$0xff]
        %v327 = vld [vmem:[%s3 + $0x38] sm:$0xff]
        %v328 = vld [vmem:[%s3 + $0x40] sm:$0xff]
        %v329 = vld [vmem:[%s3 + $0x48] sm:$0xff]
        %v330 = vld [vmem:[%s3 + $0x50] sm:$0xff]
        %v331 = vld [vmem:[%s3 + $0x58] sm:$0xff]
        %v332 = vld [vmem:[%s3 + $0x60] sm:$0xff]
        %v333 = vld [vmem:[%s3 + $0x68] sm:$0xff]
        %v334 = vld [vmem:[%s3 + $0x70] sm:$0xff]
        %v335 = vld [vmem:[%s3 + $0x78] sm:$0xff]
        %v336 = vld [vmem:[%s3 + $0x80] sm:$0xff]
        %v337 = vld [vmem:[%s3 + $0x88] sm:$0xff]
        %v338 = vld [vmem:[%s3 + $0x90] sm:$0xff]
        %v339 = vld [vmem:[%s3 + $0x98] sm:$0xff]
        %v340 = vld [vmem:[%s3 + $0xa0] sm:$0xff]
        %v341 = vld [vmem:[%s3 + $0xa8] sm:$0xff]
        %v342 = vld [vmem:[%s3 + $0xb0] sm:$0xff]
        %v343 = vld [vmem:[%s3 + $0xb8] sm:$0xff]
        %v344 = vld [vmem:[%s3 + $0xc0] sm:$0xff]
        %v345 = vld [vmem:[%s3 + $0xc8] sm:$0xff]
        %v346 = vld [vmem:[%s3 + $0xd0] sm:$0xff]
        %v347 = vld [vmem:[%s3 + $0xd8] sm:$0xff]
        %v348 = vld [vmem:[%s3 + $0xe0] sm:$0xff]
        %v349 = vld [vmem:[%s3 + $0xe8] sm:$0xff]
        %v350 = vld [vmem:[%s3 + $0xf0] sm:$0xff]
        %v351 = vld [vmem:[%s3 + $0xf8] sm:$0xff]
        %352 = vmatprep.subr.mxu0 0.0
        %353 = vmatpush1.msra.mxu0 %v320
        %354 = vmatprep.subr.mxu0 0.0
        %355 = vmatpush1.msra.mxu0 %v321
        %356 = vmatprep.subr.mxu0 0.0
        %357 = vmatpush1.msra.mxu0 %v322
        %358 = vmatprep.subr.mxu0 0.0
        %359 = vmatpush1.msra.mxu0 %v323
        %360 = vmatprep.subr.mxu0 0.0
        %361 = vmatpush1.msra.mxu0 %v324
        %362 = vmatprep.subr.mxu0 0.0
        %363 = vmatpush1.msra.mxu0 %v325
        %364 = vmatprep.subr.mxu0 0.0
        %365 = vmatpush1.msra.mxu0 %v326
        %366 = vmatprep.subr.mxu0 0.0
        %367 = vmatpush1.msra.mxu0 %v327
        %368 = vmatprep.subr.mxu0 0.0
        %369 = vmatpush1.msra.mxu0 %v328
        %370 = vmatprep.subr.mxu0 0.0
        %371 = vmatpush1.msra.mxu0 %v329
        %372 = vmatprep.subr.mxu0 0.0
        %373 = vmatpush1.msra.mxu0 %v330
        %374 = vmatprep.subr.mxu0 0.0
        %375 = vmatpush1.msra.mxu0 %v331
        %376 = vmatprep.subr.mxu0 0.0
        %377 = vmatpush1.msra.mxu0 %v332
        %378 = vmatprep.subr.mxu0 0.0
        %379 = vmatpush1.msra.mxu0 %v333
        %380 = vmatprep.subr.mxu0 0.0
        %381 = vmatpush1.msra.mxu0 %v334
        %382 = vmatprep.subr.mxu0 0.0
        %383 = vmatpush1.msra.mxu0 %v335
        %384 = vmatprep.subr.mxu0 0.0
        %385 = vmatpush1.msra.mxu0 %v336
        %386 = vmatprep.subr.mxu0 0.0
        %387 = vmatpush1.msra.mxu0 %v337
        %388 = vmatprep.subr.mxu0 0.0
        %389 = vmatpush1.msra.mxu0 %v338
        %390 = vmatprep.subr.mxu0 0.0
        %391 = vmatpush1.msra.mxu0 %v339
        %392 = vmatprep.subr.mxu0 0.0
        %393 = vmatpush1.msra.mxu0 %v340
        %394 = vmatprep.subr.mxu0 0.0
        %395 = vmatpush1.msra.mxu0 %v341
        %396 = vmatprep.subr.mxu0 0.0
        %397 = vmatpush1.msra.mxu0 %v342
        %398 = vmatprep.subr.mxu0 0.0
        %399 = vmatpush1.msra.mxu0 %v343
        %400 = vmatprep.subr.mxu0 0.0
        %401 = vmatpush1.msra.mxu0 %v344
        %402 = vmatprep.subr.mxu0 0.0
        %403 = vmatpush1.msra.mxu0 %v345
        %404 = vmatprep.subr.mxu0 0.0
        %405 = vmatpush1.msra.mxu0 %v346
        %406 = vmatprep.subr.mxu0 0.0
        %407 = vmatpush1.msra.mxu0 %v347
        %408 = vmatprep.subr.mxu0 0.0
        %409 = vmatpush1.msra.mxu0 %v348
        %410 = vmatprep.subr.mxu0 0.0
        %411 = vmatpush1.msra.mxu0 %v349
        %412 = vmatprep.subr.mxu0 0.0
        %413 = vmatpush1.msra.mxu0 %v350
        %414 = vmatprep.subr.mxu0 0.0
        %415 = vmatpush1.msra.mxu0 %v351
        %416 = vmatprep.mubr.f32.mxu0 %v318
        %417 = vmatmul.mubr.f32.gmra.mrb[0].mxu0 %v317
        %v418 = vpop.f32.mrb[0].mxu0
        %v419 = vadd.f32 0.0, %v418
        %v420 = vpop.f32.mrb[0].mxu0
        %421 = vdwg.mxu0
        %v422 = vadd.f32 %v319, %v419
        %423 = vst.msk [vmem:[#allocation2] sm:$0xff] %vm221, %v422
        %v424 = vld [vmem:[#allocation2] sm:$0xff]
        %v425 = vld [vmem:[%s4] sm:$0x1]
        %v427 = vlaneseq
        %v428 = vshrl.u32 %v427, 7
        %v429 = vsub.s32 0, %v428
        %v430 = vrot.slane %v425, %v429
        %v432 = vadd.f32 %v424, %v430
        %433 = vst.msk [vmem:[%s215] sm:$0xff] %vm221, %v432
        %s434 = sand.u32 %s137, 1
        %s435 = scalar_lea.sflag [#allocation4], %s434
        %s436 = sand.u32 %s137, 1
        %s437 = smul.addr %s436, 8
        %s438 = scalar_lea.vmem [#allocation3], %s437
        // Predicated region
        $region41: #{tpu_custom_call.1} parent=39 // pred_check
          %p439 = pneg %p147
        $region42: #{tpu_custom_call.1} parent=39 // pred_check_branch
          %441 = sbr.rel (%p439) target = $region44
        $region43: #{tpu_custom_call.1} parent=39 // pred_region
          %s443 = ssub.s32 128, 128
          %444 = vsyncadd %s435, %s443
          %s445 = smul.addr %s19, 128
          %s446 = scalar_lea.hbm %s5, %s445
          %s448 = sshll.u32 %s438, 4
          %s449 = int_to_ptr.vmem [resolvable:$true] %s448
          %451 = dma.vmem_to_hbm [thread:$0]  %s449, 128, %s446, %s435
        $region44: #{tpu_custom_call.1} parent=39 // pred_fallthru
          _
      $region40: #{tpu_custom_call.1} parent=5 // pred_fallthru
        _
      %p452 = scmp.le.s32.totalorder 2, %s14
      // Predicated region
      $region45: #{tpu_custom_call.1} parent=5 // pred_check
        %p453 = pneg %p452
      $region46: #{tpu_custom_call.1} parent=5 // pred_check_branch
        %455 = sbr.rel (%p453) target = $region48
      $region47: #{tpu_custom_call.1} parent=5 // pred_region
        %s456 = ssub.s32 %s14, 2
        // Predicated region
        $region49: #{tpu_custom_call.1} parent=47 // pred_check
          %p457 = pneg %p153
        $region50: #{tpu_custom_call.1} parent=47 // pred_check_branch
          %459 = sbr.rel (%p457) target = $region52
        $region51: #{tpu_custom_call.1} parent=47 // pred_region
          %s460 = sand.u32 %s138, 1
          %s461 = scalar_lea.sflag [#allocation4], %s460
          %s462 = sand.u32 %s138, 1
          %s463 = smul.addr %s462, 8
          %s464 = scalar_lea.vmem [#allocation3], %s463
          %465 = dma.done %s461, 128
        $region52: #{tpu_custom_call.1} parent=47 // pred_fallthru
          _
      $region48: #{tpu_custom_call.1} parent=5 // pred_fallthru
        _
    $region6: #{tpu_custom_call.1} parent=1 // loop_footer
      %s18 = sadd.s32 1, %s14
    $region7: #{tpu_custom_call.1} parent=1 // loop_footer_branch
      %13 = sbr.rel target = $region3
    $region8: #{tpu_custom_call.1} parent=1 // loop_exit
      _
    %466 = vsyncpa [#allocation4], 1
    %s467 = scalar_lea.sflag [#allocation4], 1
    %468 = vsyncpa %s467, 1

</llo_original>
